<compile_context>
chip_gen: v6e
topology: v6e:2x2x1
jax: 0.10.0
libtpu: 0.0.40
codegen_flags: <defaults>
</compile_context>

<pallas_src>
import jax
import jax.numpy as jnp
from jax import lax
from jax.experimental import pallas as pl
from jax.experimental.pallas import tpu as pltpu


def _round_up(x: int, m: int) -> int:
    return ((x + m - 1) // m) * m


def _cdiv(a: int, b: int) -> int:
    return -(-a // b)


def _choose_tb(batch: int, d: int, itemsize: int) -> int:
    """Byte-targeted batch tile size (multiple of 128)."""
    d_pad = _round_up(max(d, 1), 128)             # lane-padded row width in VMEM
    # ~4 MiB of HBM traffic per grid step amortizes the ~0.35us/step overhead
    # and sits at >=85% of the HBM roofline on v5e/v6e/v7x.
    tb_hbm = (4 << 20) // max(d * itemsize, 1)
    # Double-buffered x tile must stay inside the explicit 40 MiB VMEM limit
    # (headroom left for the lane-dense out blocks and the matmul result).
    tb_vmem = (24 << 20) // (2 * d_pad * itemsize)
    tb = max(128, min(tb_hbm, tb_vmem))
    # Keep >= 2 tiles for larger batches so dimension_semantics=("parallel",)
    # can shard tiles across v7x's two TensorCores and the pipeline overlaps.
    if batch >= 512:
        tb = min(tb, _round_up(_cdiv(batch, 2), 128))
    return max(128, (tb // 128) * 128)


def _logreg_kernel(x_ref, w_ref, b_ref, o_ref):
    # x_ref: (TB, D)    VMEM batch tile (last grid step may be partial).
    # w_ref: (8, D)     VMEM, grid-resident; 8 identical copies of w^T so the
    #                   MXU operand is a full sublane tile (row 0 = real matvec).
    # b_ref: (1, 1)     SMEM scalar bias.
    # o_ref: (1, 1, TB) VMEM lane-dense output row for this tile.
    x = x_ref[...]
    w = w_ref[...]
    # Full f32 precision when streaming f32 (keeps the 1e-5 reference match);
    # bf16 stream uses the native single-pass MXU path.
    prec = lax.Precision.HIGHEST if x.dtype == jnp.float32 else lax.Precision.DEFAULT
    # q@k^T-style contraction over D puts the batch on the LANE axis of the
    # result -> unmasked, lane-dense stores with no (TB,1)->(1,TB) relayout.
    z = lax.dot_general(
        w, x, (((1,), (1,)), ((), ())),
        precision=prec,
        preferred_element_type=jnp.float32,
    )[0:1, :]                                     # (1, TB) f32
    z = z + b_ref[0, 0]                           # scalar bias from SMEM
    # Sigmoid: exp runs on the EUP; exact reciprocal keeps the 1e-5 tolerance
    # (approx=True would be free here but adds ~2e-4 abs error near 1.0).
    o_ref[...] = pl.reciprocal(1.0 + jnp.exp(-z))[None]


def logistic_regression_forward(x, w, b, *, tb=None, dtype=jnp.float32):
    """sigmoid(x @ w + b), i.e. LogisticRegression.forward.

    x: (B, D); w: (D, 1) (or (D,) / (1, D)); b: scalar / (1,) / (1, 1).
    Returns (B, 1) float32.

    dtype: dtype of the HBM->VMEM stream for x/w. float32 (default) matches
      the f32 PyTorch reference; bfloat16 halves HBM traffic (~2x wall time on
      this mem-bound kernel) at ~1e-3 absolute output error.
    """
    x = jnp.asarray(x)
    if x.ndim != 2:
        raise ValueError(f"expected x of shape (B, D), got {x.shape}")
    B, D = x.shape
    x = x.astype(dtype)

    # Lane-dense weight, replicated to 8 sublanes (full MXU operand tile).
    w_row = jnp.asarray(w).reshape(1, D).astype(dtype)
    w_mat = jnp.broadcast_to(w_row, (8, D))
    b_smem = jnp.asarray(b, jnp.float32).reshape(1, 1)

    itemsize = jnp.dtype(dtype).itemsize
    if tb is None:
        tb = _choose_tb(B, D, itemsize)
    tb = min(int(tb), B)          # a single full-batch block is always legal
    if tb < B:
        tb = max(16, (tb // 16) * 16)   # sublane-aligned for both f32 and bf16
    n_tiles = _cdiv(B, tb)        # last block may be partial -- no jnp.pad copy

    out = pl.pallas_call(
        _logreg_kernel,
        out_shape=jax.ShapeDtypeStruct((n_tiles, 1, tb), jnp.float32),
        grid=(n_tiles,),
        in_specs=[
            pl.BlockSpec((tb, D), lambda i: (i, 0)),             # x batch tile
            pl.BlockSpec((8, D), lambda i: (0, 0)),              # w, grid-resident
            pl.BlockSpec(memory_space=pltpu.MemorySpace.SMEM),   # bias scalar
        ],
        out_specs=pl.BlockSpec((1, 1, tb), lambda i: (i, 0, 0)),  # lane-dense row
        compiler_params=pltpu.CompilerParams(
            dimension_semantics=("parallel",),  # shard tiles across TCs on v7x
            vmem_limit_bytes=40 << 20,          # allow the byte-targeted tiles
        ),
        cost_estimate=pl.CostEstimate(
            flops=2 * B * D,
            transcendentals=B,
            bytes_accessed=B * D * itemsize + 8 * D * itemsize
                           + 4 * n_tiles * tb + 4,
        ),
    )(x, w_mat, b_smem)

    # (n_tiles, 1, tb) lane-dense result -> (B, 1); entries >= B come from the
    # partial last block's garbage rows and are intentionally dropped here.
    return out.reshape(n_tiles * tb)[:B].reshape(B, 1)


if __name__ == "__main__":
    num_inputs = 32

    key = jax.random.PRNGKey(0)
    kx, kw, kb, kx2 = jax.random.split(key, 4)

    # Parameters with the same shapes as nn.Linear(num_inputs, 1).
    w = jax.random.normal(kw, (num_inputs, 1), dtype=jnp.float32) * 0.1
    b = jax.random.normal(kb, (1, 1), dtype=jnp.float32) * 0.1

    def ref_forward(xx):
        return jax.nn.sigmoid(jnp.dot(xx, w, precision=lax.Precision.HIGHEST) + b)

    # Case 1: multi-tile grid, tile-divisible batch.
    x1 = jax.random.normal(kx, (256, num_inputs), dtype=jnp.float32)
    out1 = logistic_regression_forward(x1, w, b, tb=128)
    jax.block_until_ready(out1)
    ref1 = ref_forward(x1)
    assert out1.shape == (256, 1)
    assert jnp.allclose(out1, ref1, atol=1e-5), "mismatch vs reference (case 1)"

    # Case 2: ragged batch -> partial last block, no padding copy.
    x2 = jax.random.normal(kx2, (300, num_inputs), dtype=jnp.float32)
    out2 = logistic_regression_forward(x2, w, b, tb=128)
    jax.block_until_ready(out2)
    ref2 = ref_forward(x2)
    assert out2.shape == (300, 1)
    assert jnp.allclose(out2, ref2, atol=1e-5), "mismatch vs reference (case 2)"

    # Case 3: default byte-targeted tile selection.
    out3 = logistic_regression_forward(x2, w, b)
    jax.block_until_ready(out3)
    assert jnp.allclose(out3, ref2, atol=1e-5), "mismatch vs reference (case 3)"

    # Case 4: optional bf16 input stream (halves HBM bytes; looser tolerance).
    out4 = logistic_regression_forward(x1, w, b, tb=128, dtype=jnp.bfloat16)
    jax.block_until_ready(out4)
    assert jnp.allclose(out4, ref1, atol=2e-2), "mismatch vs reference (case 4)"

    print("KERNEL_OK")
</pallas_src>

<mosaic_0001>
module attributes {stable_mosaic.version = 11 : i64} {
  func.func @_logreg_kernel(%arg0: i32, %arg1: memref<128x32xf32, #tpu.memory_space<vmem>>, %arg2: memref<8x32xf32, #tpu.memory_space<vmem>>, %arg3: memref<1x1xf32, #tpu.memory_space<smem>>, %arg4: memref<1x1x128xf32, #tpu.memory_space<vmem>>) attributes {dimension_semantics = [#tpu.dimension_semantics<parallel>], iteration_bounds = array<i64: 2>, scalar_prefetch = 0 : i64, scratch_operands = 0 : i64, tpu.core_type = #tpu.core_type<tc>, window_params = [{transform_indices = @transform_0, window_bounds = array<i64: 128, 32>}, {pipeline_mode = #tpu.pipeline_mode<synchronous>, transform_indices = @transform_1, window_bounds = array<i64: 8, 32>}, {transform_indices = @transform_2, window_bounds = array<i64: 1, 1>}, {transform_indices = @transform_3, window_bounds = array<i64: 1, 1, 128>}]} {
    %c0 = arith.constant 0 : index
    %c0_0 = arith.constant 0 : index
    %0 = vector.load %arg1[%c0, %c0_0] : memref<128x32xf32, #tpu.memory_space<vmem>>, vector<128x32xf32>
    %c0_1 = arith.constant 0 : index
    %c0_2 = arith.constant 0 : index
    %1 = vector.load %arg2[%c0_1, %c0_2] : memref<8x32xf32, #tpu.memory_space<vmem>>, vector<8x32xf32>
    %cst = arith.constant dense<0.000000e+00> : vector<8x128xf32>
    %2 = tpu.matmul %1, %0, %cst {dimension_numbers = #tpu.dot_dimension_numbers<[1], [1], [0], [0], [0, 0, 1, 0], [], []>, precision = #tpu.contract_precision<fp32>} : vector<8x32xf32>, vector<128x32xf32>, vector<8x128xf32> -> vector<8x128xf32>
    %3 = vector.extract_strided_slice %2 {offsets = [0, 0], sizes = [1, 128], strides = [1, 1]} : vector<8x128xf32> to vector<1x128xf32>
    %c0_3 = arith.constant 0 : index
    %c0_4 = arith.constant 0 : index
    %4 = memref.load %arg3[%c0_3, %c0_4] : memref<1x1xf32, #tpu.memory_space<smem>>
    %5 = vector.broadcast %4 : f32 to vector<1x128xf32>
    %6 = arith.addf %3, %5 : vector<1x128xf32>
    %cst_5 = arith.constant 0.000000e+00 : f32
    %7 = vector.broadcast %cst_5 : f32 to vector<1x128xf32>
    %8 = arith.subf %7, %6 : vector<1x128xf32>
    %9 = math.exp %8 : vector<1x128xf32>
    %cst_6 = arith.constant 1.000000e+00 : f32
    %10 = vector.broadcast %cst_6 : f32 to vector<1x128xf32>
    %11 = arith.addf %10, %9 : vector<1x128xf32>
    %12 = tpu.reciprocal %11 : vector<1x128xf32> -> vector<1x128xf32>
    %13 = vector.shape_cast %12 : vector<1x128xf32> to vector<1x1x128xf32>
    %c0_7 = arith.constant 0 : index
    %c0_8 = arith.constant 0 : index
    %c0_9 = arith.constant 0 : index
    %14 = vector.load %arg4[%c0_7, %c0_8, %c0_9] : memref<1x1x128xf32, #tpu.memory_space<vmem>>, vector<1x1x128xf32>
    tpu.vector_store %arg4[%c0_7, %c0_8, %c0_9], %13 {strides = array<i32>} : memref<1x1x128xf32, #tpu.memory_space<vmem>>, vector<1x1x128xf32>,
    return
  }
  func.func @transform_0(%arg0: i32) -> (i32, i32) {
    %c0_i32 = arith.constant 0 : i32
    %c0_i32_0 = arith.constant 0 : i32
    return %arg0, %c0_i32 : i32, i32
  }
  func.func @transform_1(%arg0: i32) -> (i32, i32) {
    %c0_i32 = arith.constant 0 : i32
    %c0_i32_0 = arith.constant 0 : i32
    %c0_i32_1 = arith.constant 0 : i32
    return %c0_i32, %c0_i32_0 : i32, i32
  }
  func.func @transform_2(%arg0: i32) -> (i32, i32) {
    %c0_i32 = arith.constant 0 : i32
    %c0_i32_0 = arith.constant 0 : i32
    %c0_i32_1 = arith.constant 0 : i32
    return %c0_i32, %c0_i32_0 : i32, i32
  }
  func.func @transform_3(%arg0: i32) -> (i32, i32, i32) {
    %c0_i32 = arith.constant 0 : i32
    %c0_i32_0 = arith.constant 0 : i32
    %c0_i32_1 = arith.constant 0 : i32
    return %arg0, %c0_i32, %c0_i32_0 : i32, i32, i32
  }
}

</mosaic_0001>

<llo_original>
// kernel: tpu_custom_call.1
$region0: #{tpu_custom_call.1}
  #allocation0 [shape = 'u32[]', space=smem, size = 0x4, offset = 0x4, fixed_abs, tag = 'smem constant byte address 0x4 - core index']
  #allocation1 [shape = 'u32[144,128]{1,0:T(1,128)}', space=vmem, size = 0x12000, scoped, tag = 'internal scratch']
  #allocation2 [shape = 'f32[1,1]{1,0:T(1,128)S(6)}', space=smem, size = 0x200, scoped, tag = 'scoped memory for tpu_custom_call.1']
  %s0 = inlined_call_operand.vmem [shape: f32[256,32], index: 0, kind: input, shape index: {}]
  %s1 = inlined_call_operand.vmem [shape: f32[8,32], index: 1, kind: input, shape index: {}]
  %s2 = inlined_call_operand.<no memory space> [shape: f32[1,1], index: 2, kind: input, shape index: {}]
  %s3 = inlined_call_operand.hbm [shape: f32[2,1,128], index: 3, kind: output, shape index: {}]
  %s4 = sld [smem:[#allocation0]]
  $region45: #{tpu_custom_call.1} parent=0
    _
  %s6 = ssub.s32 1, %s4
  %s7 = scalar_select 0, %s6, %s4
  %8 = sst [smem:[#allocation2]] %s2
  $region1: #{tpu_custom_call.1} parent=0
    #allocation3 [shape = 'u8[1024]{0}', space=vmem, size = 0x400, scoped, tag = 'output window, operand 0']
    #allocation4 [shape = 's32[2]{0}', space=sflag, size = 0x8, scoped, tag = 'scoped memory for tpu_custom_call.1']
    %9 = vsyncpa [#allocation4], 0
    %s10 = scalar_lea.sflag [#allocation4], 1
    %11 = vsyncpa %s10, 0
    loop: start=0, step=1, limit=4
    $region2: #{tpu_custom_call.1} parent=1 // loop_pre_header
      _
    $region3: #{tpu_custom_call.1} parent=1 // loop_header
      %s13 = sphi 0, %s17
      %p14 = scmp.ge.s32.totalorder %s13, 4
      %s23 = sphi 0, %s25
      %s26 = sphi 0, %s23
      %s27 = sphi 0, %s26
      %s43 = sphi 0, %s27
      %s47 = sphi 0, %s47
      %s49 = sphi 0, %s47
      %s50 = sphi 0, %s49
      %s64 = sphi 0, %s50
      %s68 = sphi 0, %s68
      %s70 = sphi 0, %s68
      %s71 = sphi 0, %s70
      %s85 = sphi 0, %s71
      %s91 = sphi 0, %s93
      %s94 = sphi 0, %s91
      %s95 = sphi 0, %s94
      %s111 = sphi 0, %s95
    $region4: #{tpu_custom_call.1} parent=1 // loop_header_branch
      %16 = sbr.rel (%p14) target = $region8
    $region5: #{tpu_custom_call.1} parent=1 // loop_body
      %s18 = ssub.s32 %s13, 1
      %s19 = ssub.s32 %s13, 2
      %s20 = sadd.s32 %s13, 1
      %s21 = ssub.s32 %s13, %s20
      %p22 = scmp.eq.s32.totalorder %s21, 0
      %s24 = sadd.s32 %s23, 1
      %s25 = scalar_select %p22, %s23, %s24
      %p28 = pneg %p22
      %p29 = scmp.eq.s32.totalorder %s13, 1
      %p30 = por %p28, %p29
      %p31 = scmp.ne.s32.totalorder %s23, %s26
      %p32 = scmp.eq.s32.totalorder %s13, 0
      %p33 = por %p31, %p32
      %p34 = scmp.ne.s32.totalorder %s23, %s26
      %p35 = scmp.eq.s32.totalorder %s18, 1
      %p36 = por %p34, %p35
      %p37 = scmp.ne.s32.totalorder %s26, %s27
      %p38 = scmp.eq.s32.totalorder %s18, 0
      %p39 = por %p37, %p38
      %p40 = scmp.ne.s32.totalorder %s26, %s27
      %p41 = scmp.eq.s32.totalorder %s19, 1
      %p42 = por %p40, %p41
      %p44 = scmp.ne.s32.totalorder %s27, %s43
      %p45 = scmp.eq.s32.totalorder %s19, 0
      %p46 = por %p44, %p45
      %s48 = sadd.s32 %s47, 1
      %p51 = scmp.eq.s32.totalorder %s13, 1
      %p52 = scmp.ne.s32.totalorder %s47, %s49
      %p53 = scmp.eq.s32.totalorder %s13, 0
      %p54 = por %p52, %p53
      %p55 = scmp.ne.s32.totalorder %s47, %s49
      %p56 = scmp.eq.s32.totalorder %s18, 1
      %p57 = por %p55, %p56
      %p58 = scmp.ne.s32.totalorder %s49, %s50
      %p59 = scmp.eq.s32.totalorder %s18, 0
      %p60 = por %p58, %p59
      %p61 = scmp.ne.s32.totalorder %s49, %s50
      %p62 = scmp.eq.s32.totalorder %s19, 1
      %p63 = por %p61, %p62
      %p65 = scmp.ne.s32.totalorder %s50, %s64
      %p66 = scmp.eq.s32.totalorder %s19, 0
      %p67 = por %p65, %p66
      %s69 = sadd.s32 %s68, 1
      %p72 = scmp.eq.s32.totalorder %s13, 1
      %p73 = scmp.ne.s32.totalorder %s68, %s70
      %p74 = scmp.eq.s32.totalorder %s13, 0
      %p75 = por %p73, %p74
      %p76 = scmp.ne.s32.totalorder %s68, %s70
      %p77 = scmp.eq.s32.totalorder %s18, 1
      %p78 = por %p76, %p77
      %p79 = scmp.ne.s32.totalorder %s70, %s71
      %p80 = scmp.eq.s32.totalorder %s18, 0
      %p81 = por %p79, %p80
      %p82 = scmp.ne.s32.totalorder %s70, %s71
      %p83 = scmp.eq.s32.totalorder %s19, 1
      %p84 = por %p82, %p83
      %p86 = scmp.ne.s32.totalorder %s71, %s85
      %p87 = scmp.eq.s32.totalorder %s19, 0
      %p88 = por %p86, %p87
      %s89 = ssub.s32 %s13, %s20
      %p90 = scmp.eq.s32.totalorder %s89, 0
      %s92 = sadd.s32 %s91, 1
      %s93 = scalar_select %p90, %s91, %s92
      %p96 = pneg %p90
      %p97 = scmp.eq.s32.totalorder %s13, 1
      %p98 = por %p96, %p97
      %p99 = scmp.ne.s32.totalorder %s91, %s94
      %p100 = scmp.eq.s32.totalorder %s13, 0
      %p101 = por %p99, %p100
      %p102 = scmp.ne.s32.totalorder %s91, %s94
      %p103 = scmp.eq.s32.totalorder %s18, 1
      %p104 = por %p102, %p103
      %p105 = scmp.ne.s32.totalorder %s94, %s95
      %p106 = scmp.eq.s32.totalorder %s18, 0
      %p107 = por %p105, %p106
      %p108 = scmp.ne.s32.totalorder %s94, %s95
      %p109 = scmp.eq.s32.totalorder %s19, 1
      %p110 = por %p108, %p109
      %p112 = scmp.ne.s32.totalorder %s95, %s111
      %p113 = scmp.eq.s32.totalorder %s19, 0
      %p114 = por %p112, %p113
      %p115 = scmp.le.s32.totalorder 1, %s13
      %p116 = scmp.lt.s32.totalorder %s13, 3
      %p117 = pnand %p115, %p116
      %p118 = pneg %p117
      // Predicated region
      $region9: #{tpu_custom_call.1} parent=5 // pred_check
        _
      $region10: #{tpu_custom_call.1} parent=5 // pred_check_branch
        %120 = sbr.rel (%p117) target = $region12
      $region11: #{tpu_custom_call.1} parent=5 // pred_region
        %s121 = ssub.s32 %s13, 1
        // Predicated region
        $region13: #{tpu_custom_call.1} parent=11 // pred_check
          %p122 = pneg %p60
        $region14: #{tpu_custom_call.1} parent=11 // pred_check_branch
          %124 = sbr.rel (%p122) target = $region16
        $region15: #{tpu_custom_call.1} parent=11 // pred_region
          _
        $region16: #{tpu_custom_call.1} parent=11 // pred_fallthru
          _
        // Predicated region
        $region17: #{tpu_custom_call.1} parent=11 // pred_check
          %p125 = pneg %p81
        $region18: #{tpu_custom_call.1} parent=11 // pred_check_branch
          %127 = sbr.rel (%p125) target = $region20
        $region19: #{tpu_custom_call.1} parent=11 // pred_region
          _
        $region20: #{tpu_custom_call.1} parent=11 // pred_fallthru
          _
      $region12: #{tpu_custom_call.1} parent=5 // pred_fallthru
        _
      %p128 = scmp.lt.s32.totalorder %s13, 2
      // Predicated region
      $region21: #{tpu_custom_call.1} parent=5 // pred_check
        %p129 = pneg %p128
      $region22: #{tpu_custom_call.1} parent=5 // pred_check_branch
        %131 = sbr.rel (%p129) target = $region24
      $region23: #{tpu_custom_call.1} parent=5 // pred_region
        // Predicated region
        $region25: #{tpu_custom_call.1} parent=23 // pred_check
          %p132 = pneg %p33
        $region26: #{tpu_custom_call.1} parent=23 // pred_check_branch
          %134 = sbr.rel (%p132) target = $region28
        $region27: #{tpu_custom_call.1} parent=23 // pred_region
          %s135 = smul.u32 16, %s13
          %p136 = scmp.lt.s32.totalorder %s135, 31
          %s137 = scalar_select %p136, %s135, 31
          %s138 = smul.addr %s137, 8
          %s139 = scalar_lea.vmem %s0, %s138
          %s140 = smul.u32 16, %s13
        $region28: #{tpu_custom_call.1} parent=23 // pred_fallthru
          _
      $region24: #{tpu_custom_call.1} parent=5 // pred_fallthru
        _
      %p141 = scmp.le.s32.totalorder 1, %s13
      %p142 = scmp.lt.s32.totalorder %s13, 3
      %p143 = pnand %p141, %p142
      %p144 = pneg %p143
      // Predicated region
      $region29: #{tpu_custom_call.1} parent=5 // pred_check
        _
      $region30: #{tpu_custom_call.1} parent=5 // pred_check_branch
        %146 = sbr.rel (%p143) target = $region32
      $region31: #{tpu_custom_call.1} parent=5 // pred_region
        %s147 = ssub.s32 %s13, 1
        %s148 = smul.u32 16, %s18
        %p149 = scmp.lt.s32.totalorder %s148, 31
        %s150 = scalar_select %p149, %s148, 31
        %s151 = smul.addr %s150, 8
        %s152 = scalar_lea.vmem %s0, %s151
        %p153 = pneg %p39
        %p154 = pneg %p36
        %p155 = pneg %p60
        %p156 = pneg %p57
        %p157 = pneg %p81
        %p158 = pneg %p78
        %p159 = pneg %p107
        %p160 = pneg %p104
        %s161 = sand.u32 %s94, 1
        %s162 = scalar_lea.sflag [#allocation4], %s161
        %s163 = sand.u32 %s94, 1
        %s164 = scalar_lea.vmem [#allocation3], %s163
        %s165 = smul.u32 16, %s18
        %p166 = scmp.lt.s32.totalorder %s165, 31
        %s167 = scalar_select %p166, %s165, 31
        %s168 = smul.addr %s167, 8
        %s169 = scalar_lea.vmem %s0, %s168
        %s170 = smul.u32 16, %s18
        %v171 = vld [vmem:[%s169] sm:$0xff]
        %v172 = vld [vmem:[%s169 + $0x8] sm:$0xff]
        %v173 = vld [vmem:[%s169 + $0x10] sm:$0xff]
        %v174 = vld [vmem:[%s169 + $0x18] sm:$0xff]
        %v175 = vld [vmem:[%s169 + $0x20] sm:$0xff]
        %v176 = vld [vmem:[%s169 + $0x28] sm:$0xff]
        %v177 = vld [vmem:[%s169 + $0x30] sm:$0xff]
        %v178 = vld [vmem:[%s169 + $0x38] sm:$0xff]
        %v179 = vld [vmem:[%s169 + $0x40] sm:$0xff]
        %v180 = vld [vmem:[%s169 + $0x48] sm:$0xff]
        %v181 = vld [vmem:[%s169 + $0x50] sm:$0xff]
        %v182 = vld [vmem:[%s169 + $0x58] sm:$0xff]
        %v183 = vld [vmem:[%s169 + $0x60] sm:$0xff]
        %v184 = vld [vmem:[%s169 + $0x68] sm:$0xff]
        %v185 = vld [vmem:[%s169 + $0x70] sm:$0xff]
        %v186 = vld [vmem:[%s169 + $0x78] sm:$0xff]
        %v187 = vld [vmem:[%s1] sm:$0xff]
        %vm188 = vcmask 261120
        %v190 = vsel %vm188, %v187, 0
        %v193 = vsel %vm188, %v171, 0
        %v196 = vsel %vm188, %v172, 0
        %v199 = vsel %vm188, %v173, 0
        %v202 = vsel %vm188, %v174, 0
        %v205 = vsel %vm188, %v175, 0
        %v208 = vsel %vm188, %v176, 0
        %v211 = vsel %vm188, %v177, 0
        %v214 = vsel %vm188, %v178, 0
        %v217 = vsel %vm188, %v179, 0
        %v220 = vsel %vm188, %v180, 0
        %v223 = vsel %vm188, %v181, 0
        %v226 = vsel %vm188, %v182, 0
        %v229 = vsel %vm188, %v183, 0
        %v232 = vsel %vm188, %v184, 0
        %v235 = vsel %vm188, %v185, 0
        %v238 = vsel %vm188, %v186, 0
        %240 = vmatprep.subr.mxu0 0.0
        %v241 = vand.u32 %v238, 4294901760
        %242 = vmatpush1.xpose.msra.mxu0 %v241
        %243 = vmatprep.subr.mxu0 0.0
        %v244 = vand.u32 %v235, 4294901760
        %245 = vmatpush1.xpose.msra.mxu0 %v244
        %246 = vmatprep.subr.mxu0 0.0
        %v247 = vand.u32 %v232, 4294901760
        %248 = vmatpush1.xpose.msra.mxu0 %v247
        %249 = vmatprep.subr.mxu0 0.0
        %v250 = vand.u32 %v229, 4294901760
        %251 = vmatpush1.xpose.msra.mxu0 %v250
        %252 = vmatprep.subr.mxu0 0.0
        %v253 = vand.u32 %v226, 4294901760
        %254 = vmatpush1.xpose.msra.mxu0 %v253
        %255 = vmatprep.subr.mxu0 0.0
        %v256 = vand.u32 %v223, 4294901760
        %257 = vmatpush1.xpose.msra.mxu0 %v256
        %258 = vmatprep.subr.mxu0 0.0
        %v259 = vand.u32 %v220, 4294901760
        %260 = vmatpush1.xpose.msra.mxu0 %v259
        %261 = vmatprep.subr.mxu0 0.0
        %v262 = vand.u32 %v217, 4294901760
        %263 = vmatpush1.xpose.msra.mxu0 %v262
        %264 = vmatprep.subr.mxu0 0.0
        %v265 = vand.u32 %v214, 4294901760
        %266 = vmatpush1.xpose.msra.mxu0 %v265
        %267 = vmatprep.subr.mxu0 0.0
        %v268 = vand.u32 %v211, 4294901760
        %269 = vmatpush1.xpose.msra.mxu0 %v268
        %270 = vmatprep.subr.mxu0 0.0
        %v271 = vand.u32 %v208, 4294901760
        %272 = vmatpush1.xpose.msra.mxu0 %v271
        %273 = vmatprep.subr.mxu0 0.0
        %v274 = vand.u32 %v205, 4294901760
        %275 = vmatpush1.xpose.msra.mxu0 %v274
        %276 = vmatprep.subr.mxu0 0.0
        %v277 = vand.u32 %v202, 4294901760
        %278 = vmatpush1.xpose.msra.mxu0 %v277
        %279 = vmatprep.subr.mxu0 0.0
        %v280 = vand.u32 %v199, 4294901760
        %281 = vmatpush1.xpose.msra.mxu0 %v280
        %282 = vmatprep.subr.mxu0 0.0
        %v283 = vand.u32 %v196, 4294901760
        %284 = vmatpush1.xpose.msra.mxu0 %v283
        %285 = vmatprep.subr.mxu0 0.0
        %v286 = vand.u32 %v193, 4294901760
        %287 = vmatpush1.xpose.msra.mxu0 %v286
        %288 = vmatprep.subr.mxu0 0.0
        %289 = vmatpush2.xpose.msra.mxu0 0.0
        %290 = vmatprep.subr.mxu0 0.0
        %291 = vmatpush2.xpose.msra.mxu0 0.0
        %292 = vmatprep.subr.mxu0 0.0
        %293 = vmatpush2.xpose.msra.mxu0 0.0
        %294 = vmatprep.subr.mxu0 0.0
        %295 = vmatpush2.xpose.msra.mxu0 0.0
        %296 = vmatprep.subr.mxu0 0.0
        %297 = vmatpush2.xpose.msra.mxu0 0.0
        %298 = vmatprep.subr.mxu0 0.0
        %299 = vmatpush2.xpose.msra.mxu0 0.0
        %300 = vmatprep.subr.mxu0 0.0
        %301 = vmatpush2.xpose.msra.mxu0 0.0
        %302 = vmatprep.subr.mxu0 0.0
        %303 = vmatpush2.xpose.msra.mxu0 0.0
        %304 = vmatprep.subr.mxu0 0.0
        %305 = vmatpush2.xpose.msra.mxu0 0.0
        %306 = vmatprep.subr.mxu0 0.0
        %307 = vmatpush2.xpose.msra.mxu0 0.0
        %308 = vmatprep.subr.mxu0 0.0
        %309 = vmatpush2.xpose.msra.mxu0 0.0
        %310 = vmatprep.subr.mxu0 0.0
        %311 = vmatpush2.xpose.msra.mxu0 0.0
        %312 = vmatprep.subr.mxu0 0.0
        %313 = vmatpush2.xpose.msra.mxu0 0.0
        %314 = vmatprep.subr.mxu0 0.0
        %315 = vmatpush2.xpose.msra.mxu0 0.0
        %316 = vmatprep.subr.mxu0 0.0
        %317 = vmatpush2.xpose.msra.mxu0 0.0
        %318 = vmatprep.subr.mxu0 0.0
        %319 = vmatpush2.xpose.msra.mxu0 0.0
        %320 = vmatprep.mubr.f32.mxu0 0.0
        %v321 = vand.u32 %v190, 4294901760
        %v322 = vsub.f32 %v190, %v321
        %v323 = vand.u32 %v322, 4294901760
        %v324 = vsub.f32 %v322, %v323
        %v325 = vand.u32 %v324, 4294901760
        %326 = vmatmul.mubr.f32.gmra.mxu0 %v325
        %v327 = vpop.f32.mrf.mxu0
        %v328 = vadd.f32 0.0, %v327
        %v329 = vpop.f32.mrf.mxu0
        %330 = vdwg.mxu0
        %331 = vmatprep.subr.mxu0 0.0
        %v332 = vand.u32 %v238, 4294901760
        %v333 = vsub.f32 %v238, %v332
        %v334 = vand.u32 %v333, 4294901760
        %v335 = vsub.f32 %v333, %v334
        %v336 = vand.u32 %v335, 4294901760
        %337 = vmatpush1.xpose.msra.mxu0 %v336
        %338 = vmatprep.subr.mxu0 0.0
        %v339 = vand.u32 %v235, 4294901760
        %v340 = vsub.f32 %v235, %v339
        %v341 = vand.u32 %v340, 4294901760
        %v342 = vsub.f32 %v340, %v341
        %v343 = vand.u32 %v342, 4294901760
        %344 = vmatpush1.xpose.msra.mxu0 %v343
        %345 = vmatprep.subr.mxu0 0.0
        %v346 = vand.u32 %v232, 4294901760
        %v347 = vsub.f32 %v232, %v346
        %v348 = vand.u32 %v347, 4294901760
        %v349 = vsub.f32 %v347, %v348
        %v350 = vand.u32 %v349, 4294901760
        %351 = vmatpush1.xpose.msra.mxu0 %v350
        %352 = vmatprep.subr.mxu0 0.0
        %v353 = vand.u32 %v229, 4294901760
        %v354 = vsub.f32 %v229, %v353
        %v355 = vand.u32 %v354, 4294901760
        %v356 = vsub.f32 %v354, %v355
        %v357 = vand.u32 %v356, 4294901760
        %358 = vmatpush1.xpose.msra.mxu0 %v357
        %359 = vmatprep.subr.mxu0 0.0
        %v360 = vand.u32 %v226, 4294901760
        %v361 = vsub.f32 %v226, %v360
        %v362 = vand.u32 %v361, 4294901760
        %v363 = vsub.f32 %v361, %v362
        %v364 = vand.u32 %v363, 4294901760
        %365 = vmatpush1.xpose.msra.mxu0 %v364
        %366 = vmatprep.subr.mxu0 0.0
        %v367 = vand.u32 %v223, 4294901760
        %v368 = vsub.f32 %v223, %v367
        %v369 = vand.u32 %v368, 4294901760
        %v370 = vsub.f32 %v368, %v369
        %v371 = vand.u32 %v370, 4294901760
        %372 = vmatpush1.xpose.msra.mxu0 %v371
        %373 = vmatprep.subr.mxu0 0.0
        %v374 = vand.u32 %v220, 4294901760
        %v375 = vsub.f32 %v220, %v374
        %v376 = vand.u32 %v375, 4294901760
        %v377 = vsub.f32 %v375, %v376
        %v378 = vand.u32 %v377, 4294901760
        %379 = vmatpush1.xpose.msra.mxu0 %v378
        %380 = vmatprep.subr.mxu0 0.0
        %v381 = vand.u32 %v217, 4294901760
        %v382 = vsub.f32 %v217, %v381
        %v383 = vand.u32 %v382, 4294901760
        %v384 = vsub.f32 %v382, %v383
        %v385 = vand.u32 %v384, 4294901760
        %386 = vmatpush1.xpose.msra.mxu0 %v385
        %387 = vmatprep.subr.mxu0 0.0
        %v388 = vand.u32 %v214, 4294901760
        %v389 = vsub.f32 %v214, %v388
        %v390 = vand.u32 %v389, 4294901760
        %v391 = vsub.f32 %v389, %v390
        %v392 = vand.u32 %v391, 4294901760
        %393 = vmatpush1.xpose.msra.mxu0 %v392
        %394 = vmatprep.subr.mxu0 0.0
        %v395 = vand.u32 %v211, 4294901760
        %v396 = vsub.f32 %v211, %v395
        %v397 = vand.u32 %v396, 4294901760
        %v398 = vsub.f32 %v396, %v397
        %v399 = vand.u32 %v398, 4294901760
        %400 = vmatpush1.xpose.msra.mxu0 %v399
        %401 = vmatprep.subr.mxu0 0.0
        %v402 = vand.u32 %v208, 4294901760
        %v403 = vsub.f32 %v208, %v402
        %v404 = vand.u32 %v403, 4294901760
        %v405 = vsub.f32 %v403, %v404
        %v406 = vand.u32 %v405, 4294901760
        %407 = vmatpush1.xpose.msra.mxu0 %v406
        %408 = vmatprep.subr.mxu0 0.0
        %v409 = vand.u32 %v205, 4294901760
        %v410 = vsub.f32 %v205, %v409
        %v411 = vand.u32 %v410, 4294901760
        %v412 = vsub.f32 %v410, %v411
        %v413 = vand.u32 %v412, 4294901760
        %414 = vmatpush1.xpose.msra.mxu0 %v413
        %415 = vmatprep.subr.mxu0 0.0
        %v416 = vand.u32 %v202, 4294901760
        %v417 = vsub.f32 %v202, %v416
        %v418 = vand.u32 %v417, 4294901760
        %v419 = vsub.f32 %v417, %v418
        %v420 = vand.u32 %v419, 4294901760
        %421 = vmatpush1.xpose.msra.mxu0 %v420
        %422 = vmatprep.subr.mxu0 0.0
        %v423 = vand.u32 %v199, 4294901760
        %v424 = vsub.f32 %v199, %v423
        %v425 = vand.u32 %v424, 4294901760
        %v426 = vsub.f32 %v424, %v425
        %v427 = vand.u32 %v426, 4294901760
        %428 = vmatpush1.xpose.msra.mxu0 %v427
        %429 = vmatprep.subr.mxu0 0.0
        %v430 = vand.u32 %v196, 4294901760
        %v431 = vsub.f32 %v196, %v430
        %v432 = vand.u32 %v431, 4294901760
        %v433 = vsub.f32 %v431, %v432
        %v434 = vand.u32 %v433, 4294901760
        %435 = vmatpush1.xpose.msra.mxu0 %v434
        %436 = vmatprep.subr.mxu0 0.0
        %v437 = vand.u32 %v193, 4294901760
        %v438 = vsub.f32 %v193, %v437
        %v439 = vand.u32 %v438, 4294901760
        %v440 = vsub.f32 %v438, %v439
        %v441 = vand.u32 %v440, 4294901760
        %442 = vmatpush1.xpose.msra.mxu0 %v441
        %443 = vmatprep.subr.mxu0 0.0
        %444 = vmatpush2.xpose.msra.mxu0 0.0
        %445 = vmatprep.subr.mxu0 0.0
        %446 = vmatpush2.xpose.msra.mxu0 0.0
        %447 = vmatprep.subr.mxu0 0.0
        %448 = vmatpush2.xpose.msra.mxu0 0.0
        %449 = vmatprep.subr.mxu0 0.0
        %450 = vmatpush2.xpose.msra.mxu0 0.0
        %451 = vmatprep.subr.mxu0 0.0
        %452 = vmatpush2.xpose.msra.mxu0 0.0
        %453 = vmatprep.subr.mxu0 0.0
        %454 = vmatpush2.xpose.msra.mxu0 0.0
        %455 = vmatprep.subr.mxu0 0.0
        %456 = vmatpush2.xpose.msra.mxu0 0.0
        %457 = vmatprep.subr.mxu0 0.0
        %458 = vmatpush2.xpose.msra.mxu0 0.0
        %459 = vmatprep.subr.mxu0 0.0
        %460 = vmatpush2.xpose.msra.mxu0 0.0
        %461 = vmatprep.subr.mxu0 0.0
        %462 = vmatpush2.xpose.msra.mxu0 0.0
        %463 = vmatprep.subr.mxu0 0.0
        %464 = vmatpush2.xpose.msra.mxu0 0.0
        %465 = vmatprep.subr.mxu0 0.0
        %466 = vmatpush2.xpose.msra.mxu0 0.0
        %467 = vmatprep.subr.mxu0 0.0
        %468 = vmatpush2.xpose.msra.mxu0 0.0
        %469 = vmatprep.subr.mxu0 0.0
        %470 = vmatpush2.xpose.msra.mxu0 0.0
        %471 = vmatprep.subr.mxu0 0.0
        %472 = vmatpush2.xpose.msra.mxu0 0.0
        %473 = vmatprep.subr.mxu0 0.0
        %474 = vmatpush2.xpose.msra.mxu0 0.0
        %475 = vmatprep.mubr.f32.mxu0 0.0
        %v476 = vand.u32 %v190, 4294901760
        %477 = vmatmul.mubr.f32.gmra.mxu0 %v476
        %v478 = vpop.f32.mrf.mxu0
        %v479 = vadd.f32 %v328, %v478
        %v480 = vpop.f32.mrf.mxu0
        %481 = vdwg.mxu0
        %482 = vmatprep.subr.mxu0 0.0
        %v483 = vand.u32 %v238, 4294901760
        %v484 = vsub.f32 %v238, %v483
        %485 = vmatpush1.xpose.msra.mxu0 %v484
        %486 = vmatprep.subr.mxu0 0.0
        %v487 = vand.u32 %v235, 4294901760
        %v488 = vsub.f32 %v235, %v487
        %489 = vmatpush1.xpose.msra.mxu0 %v488
        %490 = vmatprep.subr.mxu0 0.0
        %v491 = vand.u32 %v232, 4294901760
        %v492 = vsub.f32 %v232, %v491
        %493 = vmatpush1.xpose.msra.mxu0 %v492
        %494 = vmatprep.subr.mxu0 0.0
        %v495 = vand.u32 %v229, 4294901760
        %v496 = vsub.f32 %v229, %v495
        %497 = vmatpush1.xpose.msra.mxu0 %v496
        %498 = vmatprep.subr.mxu0 0.0
        %v499 = vand.u32 %v226, 4294901760
        %v500 = vsub.f32 %v226, %v499
        %501 = vmatpush1.xpose.msra.mxu0 %v500
        %502 = vmatprep.subr.mxu0 0.0
        %v503 = vand.u32 %v223, 4294901760
        %v504 = vsub.f32 %v223, %v503
        %505 = vmatpush1.xpose.msra.mxu0 %v504
        %506 = vmatprep.subr.mxu0 0.0
        %v507 = vand.u32 %v220, 4294901760
        %v508 = vsub.f32 %v220, %v507
        %509 = vmatpush1.xpose.msra.mxu0 %v508
        %510 = vmatprep.subr.mxu0 0.0
        %v511 = vand.u32 %v217, 4294901760
        %v512 = vsub.f32 %v217, %v511
        %513 = vmatpush1.xpose.msra.mxu0 %v512
        %514 = vmatprep.subr.mxu0 0.0
        %v515 = vand.u32 %v214, 4294901760
        %v516 = vsub.f32 %v214, %v515
        %517 = vmatpush1.xpose.msra.mxu0 %v516
        %518 = vmatprep.subr.mxu0 0.0
        %v519 = vand.u32 %v211, 4294901760
        %v520 = vsub.f32 %v211, %v519
        %521 = vmatpush1.xpose.msra.mxu0 %v520
        %522 = vmatprep.subr.mxu0 0.0
        %v523 = vand.u32 %v208, 4294901760
        %v524 = vsub.f32 %v208, %v523
        %525 = vmatpush1.xpose.msra.mxu0 %v524
        %526 = vmatprep.subr.mxu0 0.0
        %v527 = vand.u32 %v205, 4294901760
        %v528 = vsub.f32 %v205, %v527
        %529 = vmatpush1.xpose.msra.mxu0 %v528
        %530 = vmatprep.subr.mxu0 0.0
        %v531 = vand.u32 %v202, 4294901760
        %v532 = vsub.f32 %v202, %v531
        %533 = vmatpush1.xpose.msra.mxu0 %v532
        %534 = vmatprep.subr.mxu0 0.0
        %v535 = vand.u32 %v199, 4294901760
        %v536 = vsub.f32 %v199, %v535
        %537 = vmatpush1.xpose.msra.mxu0 %v536
        %538 = vmatprep.subr.mxu0 0.0
        %v539 = vand.u32 %v196, 4294901760
        %v540 = vsub.f32 %v196, %v539
        %541 = vmatpush1.xpose.msra.mxu0 %v540
        %542 = vmatprep.subr.mxu0 0.0
        %v543 = vand.u32 %v193, 4294901760
        %v544 = vsub.f32 %v193, %v543
        %545 = vmatpush1.xpose.msra.mxu0 %v544
        %546 = vmatprep.subr.mxu0 0.0
        %547 = vmatpush2.xpose.msra.mxu0 0.0
        %548 = vmatprep.subr.mxu0 0.0
        %549 = vmatpush2.xpose.msra.mxu0 0.0
        %550 = vmatprep.subr.mxu0 0.0
        %551 = vmatpush2.xpose.msra.mxu0 0.0
        %552 = vmatprep.subr.mxu0 0.0
        %553 = vmatpush2.xpose.msra.mxu0 0.0
        %554 = vmatprep.subr.mxu0 0.0
        %555 = vmatpush2.xpose.msra.mxu0 0.0
        %556 = vmatprep.subr.mxu0 0.0
        %557 = vmatpush2.xpose.msra.mxu0 0.0
        %558 = vmatprep.subr.mxu0 0.0
        %559 = vmatpush2.xpose.msra.mxu0 0.0
        %560 = vmatprep.subr.mxu0 0.0
        %561 = vmatpush2.xpose.msra.mxu0 0.0
        %562 = vmatprep.subr.mxu0 0.0
        %563 = vmatpush2.xpose.msra.mxu0 0.0
        %564 = vmatprep.subr.mxu0 0.0
        %565 = vmatpush2.xpose.msra.mxu0 0.0
        %566 = vmatprep.subr.mxu0 0.0
        %567 = vmatpush2.xpose.msra.mxu0 0.0
        %568 = vmatprep.subr.mxu0 0.0
        %569 = vmatpush2.xpose.msra.mxu0 0.0
        %570 = vmatprep.subr.mxu0 0.0
        %571 = vmatpush2.xpose.msra.mxu0 0.0
        %572 = vmatprep.subr.mxu0 0.0
        %573 = vmatpush2.xpose.msra.mxu0 0.0
        %574 = vmatprep.subr.mxu0 0.0
        %575 = vmatpush2.xpose.msra.mxu0 0.0
        %576 = vmatprep.subr.mxu0 0.0
        %577 = vmatpush2.xpose.msra.mxu0 0.0
        %578 = vmatprep.mubr.f32.mxu0 0.0
        %v579 = vand.u32 %v190, 4294901760
        %v580 = vsub.f32 %v190, %v579
        %581 = vmatmul.mubr.f32.gmra.mxu0 %v580
        %v582 = vpop.f32.mrf.mxu0
        %v583 = vadd.f32 %v479, %v582
        %v584 = vpop.f32.mrf.mxu0
        %585 = vdwg.mxu0
        %586 = vmatprep.subr.mxu0 0.0
        %v587 = vand.u32 %v238, 4294901760
        %588 = vmatpush1.xpose.msra.mxu0 %v587
        %589 = vmatprep.subr.mxu0 0.0
        %v590 = vand.u32 %v235, 4294901760
        %591 = vmatpush1.xpose.msra.mxu0 %v590
        %592 = vmatprep.subr.mxu0 0.0
        %v593 = vand.u32 %v232, 4294901760
        %594 = vmatpush1.xpose.msra.mxu0 %v593
        %595 = vmatprep.subr.mxu0 0.0
        %v596 = vand.u32 %v229, 4294901760
        %597 = vmatpush1.xpose.msra.mxu0 %v596
        %598 = vmatprep.subr.mxu0 0.0
        %v599 = vand.u32 %v226, 4294901760
        %600 = vmatpush1.xpose.msra.mxu0 %v599
        %601 = vmatprep.subr.mxu0 0.0
        %v602 = vand.u32 %v223, 4294901760
        %603 = vmatpush1.xpose.msra.mxu0 %v602
        %604 = vmatprep.subr.mxu0 0.0
        %v605 = vand.u32 %v220, 4294901760
        %606 = vmatpush1.xpose.msra.mxu0 %v605
        %607 = vmatprep.subr.mxu0 0.0
        %v608 = vand.u32 %v217, 4294901760
        %609 = vmatpush1.xpose.msra.mxu0 %v608
        %610 = vmatprep.subr.mxu0 0.0
        %v611 = vand.u32 %v214, 4294901760
        %612 = vmatpush1.xpose.msra.mxu0 %v611
        %613 = vmatprep.subr.mxu0 0.0
        %v614 = vand.u32 %v211, 4294901760
        %615 = vmatpush1.xpose.msra.mxu0 %v614
        %616 = vmatprep.subr.mxu0 0.0
        %v617 = vand.u32 %v208, 4294901760
        %618 = vmatpush1.xpose.msra.mxu0 %v617
        %619 = vmatprep.subr.mxu0 0.0
        %v620 = vand.u32 %v205, 4294901760
        %621 = vmatpush1.xpose.msra.mxu0 %v620
        %622 = vmatprep.subr.mxu0 0.0
        %v623 = vand.u32 %v202, 4294901760
        %624 = vmatpush1.xpose.msra.mxu0 %v623
        %625 = vmatprep.subr.mxu0 0.0
        %v626 = vand.u32 %v199, 4294901760
        %627 = vmatpush1.xpose.msra.mxu0 %v626
        %628 = vmatprep.subr.mxu0 0.0
        %v629 = vand.u32 %v196, 4294901760
        %630 = vmatpush1.xpose.msra.mxu0 %v629
        %631 = vmatprep.subr.mxu0 0.0
        %v632 = vand.u32 %v193, 4294901760
        %633 = vmatpush1.xpose.msra.mxu0 %v632
        %634 = vmatprep.subr.mxu0 0.0
        %635 = vmatpush2.xpose.msra.mxu0 0.0
        %636 = vmatprep.subr.mxu0 0.0
        %637 = vmatpush2.xpose.msra.mxu0 0.0
        %638 = vmatprep.subr.mxu0 0.0
        %639 = vmatpush2.xpose.msra.mxu0 0.0
        %640 = vmatprep.subr.mxu0 0.0
        %641 = vmatpush2.xpose.msra.mxu0 0.0
        %642 = vmatprep.subr.mxu0 0.0
        %643 = vmatpush2.xpose.msra.mxu0 0.0
        %644 = vmatprep.subr.mxu0 0.0
        %645 = vmatpush2.xpose.msra.mxu0 0.0
        %646 = vmatprep.subr.mxu0 0.0
        %647 = vmatpush2.xpose.msra.mxu0 0.0
        %648 = vmatprep.subr.mxu0 0.0
        %649 = vmatpush2.xpose.msra.mxu0 0.0
        %650 = vmatprep.subr.mxu0 0.0
        %651 = vmatpush2.xpose.msra.mxu0 0.0
        %652 = vmatprep.subr.mxu0 0.0
        %653 = vmatpush2.xpose.msra.mxu0 0.0
        %654 = vmatprep.subr.mxu0 0.0
        %655 = vmatpush2.xpose.msra.mxu0 0.0
        %656 = vmatprep.subr.mxu0 0.0
        %657 = vmatpush2.xpose.msra.mxu0 0.0
        %658 = vmatprep.subr.mxu0 0.0
        %659 = vmatpush2.xpose.msra.mxu0 0.0
        %660 = vmatprep.subr.mxu0 0.0
        %661 = vmatpush2.xpose.msra.mxu0 0.0
        %662 = vmatprep.subr.mxu0 0.0
        %663 = vmatpush2.xpose.msra.mxu0 0.0
        %664 = vmatprep.subr.mxu0 0.0
        %665 = vmatpush2.xpose.msra.mxu0 0.0
        %666 = vmatprep.mubr.f32.mxu0 0.0
        %v667 = vand.u32 %v190, 4294901760
        %v668 = vsub.f32 %v190, %v667
        %v669 = vand.u32 %v668, 4294901760
        %670 = vmatmul.mubr.f32.gmra.mxu0 %v669
        %v671 = vpop.f32.mrf.mxu0
        %v672 = vadd.f32 %v583, %v671
        %v673 = vpop.f32.mrf.mxu0
        %674 = vdwg.mxu0
        %675 = vmatprep.subr.mxu0 0.0
        %v676 = vand.u32 %v238, 4294901760
        %v677 = vsub.f32 %v238, %v676
        %v678 = vand.u32 %v677, 4294901760
        %679 = vmatpush1.xpose.msra.mxu0 %v678
        %680 = vmatprep.subr.mxu0 0.0
        %v681 = vand.u32 %v235, 4294901760
        %v682 = vsub.f32 %v235, %v681
        %v683 = vand.u32 %v682, 4294901760
        %684 = vmatpush1.xpose.msra.mxu0 %v683
        %685 = vmatprep.subr.mxu0 0.0
        %v686 = vand.u32 %v232, 4294901760
        %v687 = vsub.f32 %v232, %v686
        %v688 = vand.u32 %v687, 4294901760
        %689 = vmatpush1.xpose.msra.mxu0 %v688
        %690 = vmatprep.subr.mxu0 0.0
        %v691 = vand.u32 %v229, 4294901760
        %v692 = vsub.f32 %v229, %v691
        %v693 = vand.u32 %v692, 4294901760
        %694 = vmatpush1.xpose.msra.mxu0 %v693
        %695 = vmatprep.subr.mxu0 0.0
        %v696 = vand.u32 %v226, 4294901760
        %v697 = vsub.f32 %v226, %v696
        %v698 = vand.u32 %v697, 4294901760
        %699 = vmatpush1.xpose.msra.mxu0 %v698
        %700 = vmatprep.subr.mxu0 0.0
        %v701 = vand.u32 %v223, 4294901760
        %v702 = vsub.f32 %v223, %v701
        %v703 = vand.u32 %v702, 4294901760
        %704 = vmatpush1.xpose.msra.mxu0 %v703
        %705 = vmatprep.subr.mxu0 0.0
        %v706 = vand.u32 %v220, 4294901760
        %v707 = vsub.f32 %v220, %v706
        %v708 = vand.u32 %v707, 4294901760
        %709 = vmatpush1.xpose.msra.mxu0 %v708
        %710 = vmatprep.subr.mxu0 0.0
        %v711 = vand.u32 %v217, 4294901760
        %v712 = vsub.f32 %v217, %v711
        %v713 = vand.u32 %v712, 4294901760
        %714 = vmatpush1.xpose.msra.mxu0 %v713
        %715 = vmatprep.subr.mxu0 0.0
        %v716 = vand.u32 %v214, 4294901760
        %v717 = vsub.f32 %v214, %v716
        %v718 = vand.u32 %v717, 4294901760
        %719 = vmatpush1.xpose.msra.mxu0 %v718
        %720 = vmatprep.subr.mxu0 0.0
        %v721 = vand.u32 %v211, 4294901760
        %v722 = vsub.f32 %v211, %v721
        %v723 = vand.u32 %v722, 4294901760
        %724 = vmatpush1.xpose.msra.mxu0 %v723
        %725 = vmatprep.subr.mxu0 0.0
        %v726 = vand.u32 %v208, 4294901760
        %v727 = vsub.f32 %v208, %v726
        %v728 = vand.u32 %v727, 4294901760
        %729 = vmatpush1.xpose.msra.mxu0 %v728
        %730 = vmatprep.subr.mxu0 0.0
        %v731 = vand.u32 %v205, 4294901760
        %v732 = vsub.f32 %v205, %v731
        %v733 = vand.u32 %v732, 4294901760
        %734 = vmatpush1.xpose.msra.mxu0 %v733
        %735 = vmatprep.subr.mxu0 0.0
        %v736 = vand.u32 %v202, 4294901760
        %v737 = vsub.f32 %v202, %v736
        %v738 = vand.u32 %v737, 4294901760
        %739 = vmatpush1.xpose.msra.mxu0 %v738
        %740 = vmatprep.subr.mxu0 0.0
        %v741 = vand.u32 %v199, 4294901760
        %v742 = vsub.f32 %v199, %v741
        %v743 = vand.u32 %v742, 4294901760
        %744 = vmatpush1.xpose.msra.mxu0 %v743
        %745 = vmatprep.subr.mxu0 0.0
        %v746 = vand.u32 %v196, 4294901760
        %v747 = vsub.f32 %v196, %v746
        %v748 = vand.u32 %v747, 4294901760
        %749 = vmatpush1.xpose.msra.mxu0 %v748
        %750 = vmatprep.subr.mxu0 0.0
        %v751 = vand.u32 %v193, 4294901760
        %v752 = vsub.f32 %v193, %v751
        %v753 = vand.u32 %v752, 4294901760
        %754 = vmatpush1.xpose.msra.mxu0 %v753
        %755 = vmatprep.subr.mxu0 0.0
        %756 = vmatpush2.xpose.msra.mxu0 0.0
        %757 = vmatprep.subr.mxu0 0.0
        %758 = vmatpush2.xpose.msra.mxu0 0.0
        %759 = vmatprep.subr.mxu0 0.0
        %760 = vmatpush2.xpose.msra.mxu0 0.0
        %761 = vmatprep.subr.mxu0 0.0
        %762 = vmatpush2.xpose.msra.mxu0 0.0
        %763 = vmatprep.subr.mxu0 0.0
        %764 = vmatpush2.xpose.msra.mxu0 0.0
        %765 = vmatprep.subr.mxu0 0.0
        %766 = vmatpush2.xpose.msra.mxu0 0.0
        %767 = vmatprep.subr.mxu0 0.0
        %768 = vmatpush2.xpose.msra.mxu0 0.0
        %769 = vmatprep.subr.mxu0 0.0
        %770 = vmatpush2.xpose.msra.mxu0 0.0
        %771 = vmatprep.subr.mxu0 0.0
        %772 = vmatpush2.xpose.msra.mxu0 0.0
        %773 = vmatprep.subr.mxu0 0.0
        %774 = vmatpush2.xpose.msra.mxu0 0.0
        %775 = vmatprep.subr.mxu0 0.0
        %776 = vmatpush2.xpose.msra.mxu0 0.0
        %777 = vmatprep.subr.mxu0 0.0
        %778 = vmatpush2.xpose.msra.mxu0 0.0
        %779 = vmatprep.subr.mxu0 0.0
        %780 = vmatpush2.xpose.msra.mxu0 0.0
        %781 = vmatprep.subr.mxu0 0.0
        %782 = vmatpush2.xpose.msra.mxu0 0.0
        %783 = vmatprep.subr.mxu0 0.0
        %784 = vmatpush2.xpose.msra.mxu0 0.0
        %785 = vmatprep.subr.mxu0 0.0
        %786 = vmatpush2.xpose.msra.mxu0 0.0
        %787 = vmatprep.mubr.f32.mxu0 0.0
        %v788 = vand.u32 %v190, 4294901760
        %789 = vmatmul.mubr.f32.gmra.mxu0 %v788
        %v790 = vpop.f32.mrf.mxu0
        %v791 = vadd.f32 %v672, %v790
        %v792 = vpop.f32.mrf.mxu0
        %793 = vdwg.mxu0
        %794 = vmatprep.subr.mxu0 0.0
        %v795 = vand.u32 %v238, 4294901760
        %796 = vmatpush1.xpose.msra.mxu0 %v795
        %797 = vmatprep.subr.mxu0 0.0
        %v798 = vand.u32 %v235, 4294901760
        %799 = vmatpush1.xpose.msra.mxu0 %v798
        %800 = vmatprep.subr.mxu0 0.0
        %v801 = vand.u32 %v232, 4294901760
        %802 = vmatpush1.xpose.msra.mxu0 %v801
        %803 = vmatprep.subr.mxu0 0.0
        %v804 = vand.u32 %v229, 4294901760
        %805 = vmatpush1.xpose.msra.mxu0 %v804
        %806 = vmatprep.subr.mxu0 0.0
        %v807 = vand.u32 %v226, 4294901760
        %808 = vmatpush1.xpose.msra.mxu0 %v807
        %809 = vmatprep.subr.mxu0 0.0
        %v810 = vand.u32 %v223, 4294901760
        %811 = vmatpush1.xpose.msra.mxu0 %v810
        %812 = vmatprep.subr.mxu0 0.0
        %v813 = vand.u32 %v220, 4294901760
        %814 = vmatpush1.xpose.msra.mxu0 %v813
        %815 = vmatprep.subr.mxu0 0.0
        %v816 = vand.u32 %v217, 4294901760
        %817 = vmatpush1.xpose.msra.mxu0 %v816
        %818 = vmatprep.subr.mxu0 0.0
        %v819 = vand.u32 %v214, 4294901760
        %820 = vmatpush1.xpose.msra.mxu0 %v819
        %821 = vmatprep.subr.mxu0 0.0
        %v822 = vand.u32 %v211, 4294901760
        %823 = vmatpush1.xpose.msra.mxu0 %v822
        %824 = vmatprep.subr.mxu0 0.0
        %v825 = vand.u32 %v208, 4294901760
        %826 = vmatpush1.xpose.msra.mxu0 %v825
        %827 = vmatprep.subr.mxu0 0.0
        %v828 = vand.u32 %v205, 4294901760
        %829 = vmatpush1.xpose.msra.mxu0 %v828
        %830 = vmatprep.subr.mxu0 0.0
        %v831 = vand.u32 %v202, 4294901760
        %832 = vmatpush1.xpose.msra.mxu0 %v831
        %833 = vmatprep.subr.mxu0 0.0
        %v834 = vand.u32 %v199, 4294901760
        %835 = vmatpush1.xpose.msra.mxu0 %v834
        %836 = vmatprep.subr.mxu0 0.0
        %v837 = vand.u32 %v196, 4294901760
        %838 = vmatpush1.xpose.msra.mxu0 %v837
        %839 = vmatprep.subr.mxu0 0.0
        %v840 = vand.u32 %v193, 4294901760
        %841 = vmatpush1.xpose.msra.mxu0 %v840
        %842 = vmatprep.subr.mxu0 0.0
        %843 = vmatpush2.xpose.msra.mxu0 0.0
        %844 = vmatprep.subr.mxu0 0.0
        %845 = vmatpush2.xpose.msra.mxu0 0.0
        %846 = vmatprep.subr.mxu0 0.0
        %847 = vmatpush2.xpose.msra.mxu0 0.0
        %848 = vmatprep.subr.mxu0 0.0
        %849 = vmatpush2.xpose.msra.mxu0 0.0
        %850 = vmatprep.subr.mxu0 0.0
        %851 = vmatpush2.xpose.msra.mxu0 0.0
        %852 = vmatprep.subr.mxu0 0.0
        %853 = vmatpush2.xpose.msra.mxu0 0.0
        %854 = vmatprep.subr.mxu0 0.0
        %855 = vmatpush2.xpose.msra.mxu0 0.0
        %856 = vmatprep.subr.mxu0 0.0
        %857 = vmatpush2.xpose.msra.mxu0 0.0
        %858 = vmatprep.subr.mxu0 0.0
        %859 = vmatpush2.xpose.msra.mxu0 0.0
        %860 = vmatprep.subr.mxu0 0.0
        %861 = vmatpush2.xpose.msra.mxu0 0.0
        %862 = vmatprep.subr.mxu0 0.0
        %863 = vmatpush2.xpose.msra.mxu0 0.0
        %864 = vmatprep.subr.mxu0 0.0
        %865 = vmatpush2.xpose.msra.mxu0 0.0
        %866 = vmatprep.subr.mxu0 0.0
        %867 = vmatpush2.xpose.msra.mxu0 0.0
        %868 = vmatprep.subr.mxu0 0.0
        %869 = vmatpush2.xpose.msra.mxu0 0.0
        %870 = vmatprep.subr.mxu0 0.0
        %871 = vmatpush2.xpose.msra.mxu0 0.0
        %872 = vmatprep.subr.mxu0 0.0
        %873 = vmatpush2.xpose.msra.mxu0 0.0
        %874 = vmatprep.mubr.f32.mxu0 0.0
        %v875 = vand.u32 %v190, 4294901760
        %876 = vmatmul.mubr.f32.gmra.mxu0 %v875
        %v877 = vpop.f32.mrf.mxu0
        %v878 = vadd.f32 %v791, %v877
        %v879 = vpop.f32.mrf.mxu0
        %880 = vdwg.mxu0
        %s881 = sld [smem:[#allocation2]]
        %v882 = vstv %s881
        %v883 = vadd.f32 %v878, %v882
        %v884 = vsub.f32 0.0, %v883
        %v885 = vmul.f32 %v884, 1.442695
        %v886 = vpow.pop %v885
        %v887 = vadd.f32 %v886, 1.0
        %v888 = vrcp.pop %v887
        %889 = vst [vmem:[%s164] sm:$0x1] %v888
        %s890 = sand.u32 %s94, 1
        %s891 = scalar_lea.sflag [#allocation4], %s890
        %s892 = sand.u32 %s94, 1
        %s893 = scalar_lea.vmem [#allocation3], %s892
        // Predicated region
        $region33: #{tpu_custom_call.1} parent=31 // pred_check
          %p894 = pneg %p104
        $region34: #{tpu_custom_call.1} parent=31 // pred_check_branch
          %896 = sbr.rel (%p894) target = $region36
        $region35: #{tpu_custom_call.1} parent=31 // pred_region
          %s898 = ssub.s32 16, 16
          %899 = vsyncadd %s891, %s898
          %s900 = smul.addr %s18, 16
          %s901 = scalar_lea.hbm %s3, %s900
          %s903 = sshll.u32 %s893, 4
          %s904 = int_to_ptr.vmem [resolvable:$true] %s903
          %906 = dma.vmem_to_hbm [thread:$0]  %s904, 16, %s901, %s891
        $region36: #{tpu_custom_call.1} parent=31 // pred_fallthru
          _
      $region32: #{tpu_custom_call.1} parent=5 // pred_fallthru
        _
      %p907 = scmp.le.s32.totalorder 2, %s13
      // Predicated region
      $region37: #{tpu_custom_call.1} parent=5 // pred_check
        %p908 = pneg %p907
      $region38: #{tpu_custom_call.1} parent=5 // pred_check_branch
        %910 = sbr.rel (%p908) target = $region40
      $region39: #{tpu_custom_call.1} parent=5 // pred_region
        %s911 = ssub.s32 %s13, 2
        // Predicated region
        $region41: #{tpu_custom_call.1} parent=39 // pred_check
          %p912 = pneg %p110
        $region42: #{tpu_custom_call.1} parent=39 // pred_check_branch
          %914 = sbr.rel (%p912) target = $region44
        $region43: #{tpu_custom_call.1} parent=39 // pred_region
          %s915 = sand.u32 %s95, 1
          %s916 = scalar_lea.sflag [#allocation4], %s915
          %s917 = sand.u32 %s95, 1
          %s918 = scalar_lea.vmem [#allocation3], %s917
          %919 = dma.done %s916, 16
        $region44: #{tpu_custom_call.1} parent=39 // pred_fallthru
          _
      $region40: #{tpu_custom_call.1} parent=5 // pred_fallthru
        _
    $region6: #{tpu_custom_call.1} parent=1 // loop_footer
      %s17 = sadd.s32 1, %s13
    $region7: #{tpu_custom_call.1} parent=1 // loop_footer_branch
      %12 = sbr.rel target = $region3
    $region8: #{tpu_custom_call.1} parent=1 // loop_exit
      _
    %920 = vsyncpa [#allocation4], 1
    %s921 = scalar_lea.sflag [#allocation4], 1
    %922 = vsyncpa %s921, 1

</llo_original>
